<compile_context>
chip_gen: v6e
topology: v6e:2x2x1
jax: 0.10.0
libtpu: 0.0.40
codegen_flags: <defaults>
</compile_context>

<pallas_src>
import functools

import jax
import jax.numpy as jnp
from jax.experimental import pallas as pl
from jax.experimental.pallas import tpu as pltpu


def residual_kernel(W, x_ref, mask_ref, wcat_ref, w3_ref, wu_ref, y_ref, col_ref):
    Cmid = w3_ref.shape[0]
    K_pad = w3_ref.shape[1]
    K = 9 * Cmid
    TILE = x_ref.shape[1]

    x = x_ref[...]                                       # (Cin+1, TILE) bf16, last row = 1

    # Fused (down_channel | trans) 1x1 convs; BN scale + all biases folded into
    # the weights, ones row of x picks up the bias column.
    z = jnp.dot(wcat_ref[...], x, preferred_element_type=jnp.float32)
    h0 = jnp.maximum(z[:Cmid, :], 0.0)                   # (Cmid, TILE)  bn_0 + ReLU
    res = z[Cmid:, :]                                    # (Cout, TILE)  bn_2-scaled trans + final bias

    # 3x3 conv (padding=1) as a single im2col matmul.  The 9 taps are lane
    # rolls (XLU) of h0, multiplied by a precomputed per-image boundary mask,
    # and written straight into a VMEM scratch (no jnp.concatenate).  Because
    # every out-of-image tap is masked to zero, rolls never leak across the
    # images packed along the lane axis.
    for t, (dy, dx) in enumerate((dy, dx) for dy in range(3) for dx in range(3)):
        off = (dy - 1) * W + (dx - 1)                    # tap reads h0[p + off]
        if off == 0:
            tap = h0
        else:
            tap = pltpu.roll(h0, (-off) % TILE, axis=1) * mask_ref[pl.ds(t, 1), :]
        col_ref[pl.ds(t * Cmid, Cmid), :] = tap
    # Padding rows are ones: column K of w3 carries the folded bn_1 bias, the
    # remaining padding columns are zero.  (Written every step so the scratch
    # is fully defined regardless of megacore grid sharding.)
    col_ref[pl.ds(K, K_pad - K), :] = jnp.ones((K_pad - K, TILE), jnp.float32)

    # bf16 MXU matmul with f32 accumulation; bn_1 bias rides along via ones row.
    h1 = jnp.dot(w3_ref[...], col_ref[...].astype(jnp.bfloat16),
                 preferred_element_type=jnp.float32)
    h1 = jnp.maximum(h1, 0.0)                            # (Cmid, TILE)

    # up_channel + residual; bn_2 scale folded into wu/res, bias already in res.
    y = jnp.dot(wu_ref[...], h1.astype(jnp.bfloat16),
                preferred_element_type=jnp.float32) + res
    y_ref[...] = jnp.maximum(y, 0.0)


def fold_params(p, dtype=jnp.bfloat16):
    """One-time fold of conv biases + inference-mode BN into bf16 weights.

    Keep Cmid/Cout multiples of 8 so the z[:Cmid]/z[Cmid:] sublane split and the
    9*Cmid im2col rows stay (8,128)-tile aligned.
    """
    Cmid, Cin = p["w_down"].shape
    Cout = p["w_up"].shape[0]
    s0, t0 = p["s0"], p["t0"]
    s1, t1 = p["s1"], p["t1"]
    s2, t2 = p["s2"], p["t2"]

    wd = p["w_down"] * s0[:, None]                       # (Cmid, Cin)
    bd = s0 * p["b_down"] + t0                           # (Cmid,)
    wt = p["w_trans"] * s2[:, None]                      # (Cout, Cin)
    bf = s2 * (p["b_up"] + p["b_trans"]) + t2            # (Cout,)

    # (Cmid+Cout, Cin+1): last column is the bias picked up by the ones row of x.
    w_cat = jnp.concatenate(
        [jnp.concatenate([wd, bd[:, None]], axis=1),
         jnp.concatenate([wt, bf[:, None]], axis=1)], axis=0)

    # (c_out, c_in, 3, 3) -> (c_out, dy, dx, c_in) -> (Cmid, 9*Cmid) matching the
    # im2col row order; column 9*Cmid carries the folded bn_1 bias.
    w3 = p["w3"] * s1[:, None, None, None]
    w3 = jnp.transpose(w3, (0, 2, 3, 1)).reshape(Cmid, 9 * Cmid)
    b3 = s1 * p["b3"] + t1
    k_pad = ((9 * Cmid + 1 + 7) // 8) * 8
    w3_aug = jnp.zeros((Cmid, k_pad), jnp.float32)
    w3_aug = w3_aug.at[:, :9 * Cmid].set(w3)
    w3_aug = w3_aug.at[:, 9 * Cmid].set(b3)

    wu = p["w_up"] * s2[:, None]                         # (Cout, Cmid)

    return {"w_cat": w_cat.astype(dtype),
            "w3": w3_aug.astype(dtype),
            "w_up": wu.astype(dtype)}


def boundary_mask(H, W, imgs_per_block):
    """(9, imgs_per_block*H*W) 0/1 mask: tap (dy,dx) in-bounds at each position."""
    hh = jnp.arange(H)[:, None]
    ww = jnp.arange(W)[None, :]
    rows = []
    for dy in range(3):
        for dx in range(3):
            ok = ((hh + dy - 1 >= 0) & (hh + dy - 1 < H) &
                  (ww + dx - 1 >= 0) & (ww + dx - 1 < W))
            rows.append(ok.reshape(-1))
    m = jnp.stack(rows).astype(jnp.float32)              # (9, H*W)
    return jnp.tile(m, (1, imgs_per_block))              # (9, TILE)


def residual_forward(x_nchw, folded, *, imgs_per_block=None):
    N, Cin, H, W = x_nchw.shape
    HW = H * W
    Cmid = folded["w3"].shape[0]
    K_pad = folded["w3"].shape[1]
    Cout = folded["w_up"].shape[0]

    # Collapse N into the lane axis: each grid step handles imgs_per_block whole
    # images (TILE lanes), amortizing grid overhead / MXU pushes / DMA.
    if imgs_per_block is None:
        imgs_per_block = max(1, min(N, 16))              # cap per-step working set
    n_blocks = pl.cdiv(N, imgs_per_block)
    N_pad = n_blocks * imgs_per_block
    TILE = imgs_per_block * HW

    x = jnp.transpose(x_nchw.reshape(N, Cin, HW), (1, 0, 2)).reshape(Cin, N * HW)
    if N_pad != N:
        x = jnp.pad(x, ((0, 0), (0, (N_pad - N) * HW)))
    # Ones row carries the folded biases through the fused down/trans matmul.
    x_aug = jnp.concatenate([x, jnp.ones((1, N_pad * HW), x.dtype)], axis=0)
    x_aug = x_aug.astype(jnp.bfloat16)                   # (Cin+1, N_pad*HW)

    mask = boundary_mask(H, W, imgs_per_block)

    kernel = functools.partial(residual_kernel, W)
    y = pl.pallas_call(
        kernel,
        out_shape=jax.ShapeDtypeStruct((Cout, N_pad * HW), jnp.float32),
        grid_spec=pltpu.PrefetchScalarGridSpec(
            num_scalar_prefetch=0,
            grid=(n_blocks,),
            in_specs=[
                pl.BlockSpec((Cin + 1, TILE), lambda i: (0, i)),          # x (lane-sliced)
                pl.BlockSpec((9, TILE), lambda i: (0, 0)),                # boundary mask
                pl.BlockSpec((Cmid + Cout, Cin + 1), lambda i: (0, 0)),   # fused 1x1 weights
                pl.BlockSpec((Cmid, K_pad), lambda i: (0, 0)),            # 3x3 weights (+bias col)
                pl.BlockSpec((Cout, Cmid), lambda i: (0, 0)),             # up_channel weights
            ],
            out_specs=pl.BlockSpec((Cout, TILE), lambda i: (0, i)),
            scratch_shapes=[pltpu.VMEM((K_pad, TILE), jnp.float32)],      # im2col scratch
        ),
        # Independent batch blocks -> megacore sharding; modest VMEM raise so
        # bigger imgs_per_block doesn't trip v5e's 16 MiB default.
        compiler_params=pltpu.CompilerParams(
            dimension_semantics=("parallel",),
            vmem_limit_bytes=32 * 1024 * 1024),
    )(x_aug, mask, folded["w_cat"], folded["w3"], folded["w_up"])

    y = y[:, :N * HW].reshape(Cout, N, H, W)
    return jnp.transpose(y, (1, 0, 2, 3))


def residual_ref(x, p):
    """Pure-JAX f32 reference on the raw (unfolded) parameters, NCHW."""
    def conv1x1(a, w, b):
        return jnp.einsum("oc,nchw->nohw", w, a) + b[None, :, None, None]

    def bn(a, s, t):
        return a * s[None, :, None, None] + t[None, :, None, None]

    h = jax.nn.relu(bn(conv1x1(x, p["w_down"], p["b_down"]), p["s0"], p["t0"]))
    h = jax.lax.conv_general_dilated(
        h, p["w3"], (1, 1), "SAME",
        dimension_numbers=("NCHW", "OIHW", "NCHW"))
    h = h + p["b3"][None, :, None, None]
    h = jax.nn.relu(bn(h, p["s1"], p["t1"]))
    y = conv1x1(h, p["w_up"], p["b_up"]) + conv1x1(x, p["w_trans"], p["b_trans"])
    return jax.nn.relu(bn(y, p["s2"], p["t2"]))


def make_params(key, Cin, Cmid, Cout):
    ks = jax.random.split(key, 11)
    f32 = jnp.float32

    def bn_affine(k, C):
        k1, k2 = jax.random.split(k)
        scale = 1.0 + 0.1 * jax.random.normal(k1, (C,), f32)  # gamma / sqrt(var+eps)
        bias = 0.1 * jax.random.normal(k2, (C,), f32)         # beta - mean*scale
        return scale, bias

    s0, t0 = bn_affine(ks[0], Cmid)
    s1, t1 = bn_affine(ks[1], Cmid)
    s2, t2 = bn_affine(ks[2], Cout)
    return {
        "w_down": 0.2 * jax.random.normal(ks[3], (Cmid, Cin), f32),
        "b_down": 0.1 * jax.random.normal(ks[4], (Cmid,), f32),
        "w3": 0.1 * jax.random.normal(ks[5], (Cmid, Cmid, 3, 3), f32),
        "b3": 0.1 * jax.random.normal(ks[6], (Cmid,), f32),
        "w_up": 0.2 * jax.random.normal(ks[7], (Cout, Cmid), f32),
        "b_up": 0.1 * jax.random.normal(ks[8], (Cout,), f32),
        "w_trans": 0.2 * jax.random.normal(ks[9], (Cout, Cin), f32),
        "b_trans": 0.1 * jax.random.normal(ks[10], (Cout,), f32),
        "s0": s0, "t0": t0, "s1": s1, "t1": t1, "s2": s2, "t2": t2,
    }


if __name__ == "__main__":
    N, Cin, Cmid, Cout, H, W = 2, 4, 8, 16, 16, 16
    key = jax.random.PRNGKey(0)
    kx, kp = jax.random.split(key)
    x = jax.random.normal(kx, (N, Cin, H, W), jnp.float32)
    params = make_params(kp, Cin, Cmid, Cout)
    folded = fold_params(params)

    y = jax.block_until_ready(residual_forward(x, folded))
    y_ref = jax.block_until_ready(residual_ref(x, params))

    assert y.shape == (N, Cout, H, W)
    err = float(jnp.max(jnp.abs(y - y_ref)))
    rel = float(jnp.linalg.norm(y - y_ref) / jnp.linalg.norm(y_ref))
    # bf16 MXU operands (f32 accumulation) -> looser tolerance than the f32 path.
    assert err < 1e-1 and rel < 2e-2, (err, rel)
    print("KERNEL_OK")
</pallas_src>

<mosaic_0001>
module attributes {stable_mosaic.version = 11 : i64} {
  func.func @residual_kernel(%arg0: i32, %arg1: memref<5x512xbf16, #tpu.memory_space<vmem>>, %arg2: memref<9x512xf32, #tpu.memory_space<vmem>>, %arg3: memref<24x5xbf16, #tpu.memory_space<vmem>>, %arg4: memref<8x80xbf16, #tpu.memory_space<vmem>>, %arg5: memref<16x8xbf16, #tpu.memory_space<vmem>>, %arg6: memref<16x512xf32, #tpu.memory_space<vmem>>, %arg7: memref<80x512xf32, #tpu.memory_space<vmem>>) attributes {dimension_semantics = [#tpu.dimension_semantics<parallel>], iteration_bounds = array<i64: 1>, scalar_prefetch = 0 : i64, scratch_operands = 1 : i64, tpu.core_type = #tpu.core_type<tc>, window_params = [{transform_indices = @transform_0, window_bounds = array<i64: 5, 512>}, {pipeline_mode = #tpu.pipeline_mode<synchronous>, transform_indices = @transform_1, window_bounds = array<i64: 9, 512>}, {pipeline_mode = #tpu.pipeline_mode<synchronous>, transform_indices = @transform_2, window_bounds = array<i64: 24, 5>}, {pipeline_mode = #tpu.pipeline_mode<synchronous>, transform_indices = @transform_3, window_bounds = array<i64: 8, 80>}, {pipeline_mode = #tpu.pipeline_mode<synchronous>, transform_indices = @transform_4, window_bounds = array<i64: 16, 8>}, {transform_indices = @transform_5, window_bounds = array<i64: 16, 512>}]} {
    %c0 = arith.constant 0 : index
    %c0_0 = arith.constant 0 : index
    %0 = vector.load %arg1[%c0, %c0_0] : memref<5x512xbf16, #tpu.memory_space<vmem>>, vector<5x512xbf16>
    %c0_1 = arith.constant 0 : index
    %c0_2 = arith.constant 0 : index
    %1 = vector.load %arg3[%c0_1, %c0_2] : memref<24x5xbf16, #tpu.memory_space<vmem>>, vector<24x5xbf16>
    %cst = arith.constant dense<0.000000e+00> : vector<24x512xf32>
    %2 = tpu.matmul %1, %0, %cst {dimension_numbers = #tpu.dot_dimension_numbers<[1], [0], [0], [1], [0, 0, 1, 1], [], []>} : vector<24x5xbf16>, vector<5x512xbf16>, vector<24x512xf32> -> vector<24x512xf32>
    %3 = vector.extract_strided_slice %2 {offsets = [0, 0], sizes = [8, 512], strides = [1, 1]} : vector<24x512xf32> to vector<8x512xf32>
    %cst_3 = arith.constant 0.000000e+00 : f32
    %4 = vector.broadcast %cst_3 : f32 to vector<8x512xf32>
    %5 = arith.maximumf %3, %4 : vector<8x512xf32>
    %6 = vector.extract_strided_slice %2 {offsets = [8, 0], sizes = [16, 512], strides = [1, 1]} : vector<24x512xf32> to vector<16x512xf32>
    %c17_i32 = arith.constant 17 : i32
    %7 = tpu.dynamic_rotate %5 by %c17_i32 dim 1 : vector<8x512xf32>, i32 -> vector<8x512xf32>
    %c0_4 = arith.constant 0 : index
    %c0_5 = arith.constant 0 : index
    %8 = vector.load %arg2[%c0_4, %c0_5] : memref<9x512xf32, #tpu.memory_space<vmem>>, vector<1x512xf32>
    %9 = vector.broadcast %8 : vector<1x512xf32> to vector<8x512xf32>
    %10 = arith.mulf %7, %9 : vector<8x512xf32>
    %c0_6 = arith.constant 0 : index
    %c0_7 = arith.constant 0 : index
    %11 = vector.load %arg7[%c0_6, %c0_7] : memref<80x512xf32, #tpu.memory_space<vmem>>, vector<8x512xf32>
    tpu.vector_store %arg7[%c0_6, %c0_7], %10 {strides = array<i32>} : memref<80x512xf32, #tpu.memory_space<vmem>>, vector<8x512xf32>,
    %c16_i32 = arith.constant 16 : i32
    %12 = tpu.dynamic_rotate %5 by %c16_i32 dim 1 : vector<8x512xf32>, i32 -> vector<8x512xf32>
    %c1 = arith.constant 1 : index
    %c0_8 = arith.constant 0 : index
    %13 = vector.load %arg2[%c1, %c0_8] : memref<9x512xf32, #tpu.memory_space<vmem>>, vector<1x512xf32>
    %14 = vector.broadcast %13 : vector<1x512xf32> to vector<8x512xf32>
    %15 = arith.mulf %12, %14 : vector<8x512xf32>
    %c8 = arith.constant 8 : index
    %c0_9 = arith.constant 0 : index
    %16 = vector.load %arg7[%c8, %c0_9] : memref<80x512xf32, #tpu.memory_space<vmem>>, vector<8x512xf32>
    tpu.vector_store %arg7[%c8, %c0_9], %15 {strides = array<i32>} : memref<80x512xf32, #tpu.memory_space<vmem>>, vector<8x512xf32>,
    %c15_i32 = arith.constant 15 : i32
    %17 = tpu.dynamic_rotate %5 by %c15_i32 dim 1 : vector<8x512xf32>, i32 -> vector<8x512xf32>
    %c2 = arith.constant 2 : index
    %c0_10 = arith.constant 0 : index
    %18 = vector.load %arg2[%c2, %c0_10] : memref<9x512xf32, #tpu.memory_space<vmem>>, vector<1x512xf32>
    %19 = vector.broadcast %18 : vector<1x512xf32> to vector<8x512xf32>
    %20 = arith.mulf %17, %19 : vector<8x512xf32>
    %c16 = arith.constant 16 : index
    %c0_11 = arith.constant 0 : index
    %21 = vector.load %arg7[%c16, %c0_11] : memref<80x512xf32, #tpu.memory_space<vmem>>, vector<8x512xf32>
    tpu.vector_store %arg7[%c16, %c0_11], %20 {strides = array<i32>} : memref<80x512xf32, #tpu.memory_space<vmem>>, vector<8x512xf32>,
    %c1_i32 = arith.constant 1 : i32
    %22 = tpu.dynamic_rotate %5 by %c1_i32 dim 1 : vector<8x512xf32>, i32 -> vector<8x512xf32>
    %c3 = arith.constant 3 : index
    %c0_12 = arith.constant 0 : index
    %23 = vector.load %arg2[%c3, %c0_12] : memref<9x512xf32, #tpu.memory_space<vmem>>, vector<1x512xf32>
    %24 = vector.broadcast %23 : vector<1x512xf32> to vector<8x512xf32>
    %25 = arith.mulf %22, %24 : vector<8x512xf32>
    %c24 = arith.constant 24 : index
    %c0_13 = arith.constant 0 : index
    %26 = vector.load %arg7[%c24, %c0_13] : memref<80x512xf32, #tpu.memory_space<vmem>>, vector<8x512xf32>
    tpu.vector_store %arg7[%c24, %c0_13], %25 {strides = array<i32>} : memref<80x512xf32, #tpu.memory_space<vmem>>, vector<8x512xf32>,
    %c32 = arith.constant 32 : index
    %c0_14 = arith.constant 0 : index
    %27 = vector.load %arg7[%c32, %c0_14] : memref<80x512xf32, #tpu.memory_space<vmem>>, vector<8x512xf32>
    tpu.vector_store %arg7[%c32, %c0_14], %5 {strides = array<i32>} : memref<80x512xf32, #tpu.memory_space<vmem>>, vector<8x512xf32>,
    %c511_i32 = arith.constant 511 : i32
    %28 = tpu.dynamic_rotate %5 by %c511_i32 dim 1 : vector<8x512xf32>, i32 -> vector<8x512xf32>
    %c5 = arith.constant 5 : index
    %c0_15 = arith.constant 0 : index
    %29 = vector.load %arg2[%c5, %c0_15] : memref<9x512xf32, #tpu.memory_space<vmem>>, vector<1x512xf32>
    %30 = vector.broadcast %29 : vector<1x512xf32> to vector<8x512xf32>
    %31 = arith.mulf %28, %30 : vector<8x512xf32>
    %c40 = arith.constant 40 : index
    %c0_16 = arith.constant 0 : index
    %32 = vector.load %arg7[%c40, %c0_16] : memref<80x512xf32, #tpu.memory_space<vmem>>, vector<8x512xf32>
    tpu.vector_store %arg7[%c40, %c0_16], %31 {strides = array<i32>} : memref<80x512xf32, #tpu.memory_space<vmem>>, vector<8x512xf32>,
    %c497_i32 = arith.constant 497 : i32
    %33 = tpu.dynamic_rotate %5 by %c497_i32 dim 1 : vector<8x512xf32>, i32 -> vector<8x512xf32>
    %c6 = arith.constant 6 : index
    %c0_17 = arith.constant 0 : index
    %34 = vector.load %arg2[%c6, %c0_17] : memref<9x512xf32, #tpu.memory_space<vmem>>, vector<1x512xf32>
    %35 = vector.broadcast %34 : vector<1x512xf32> to vector<8x512xf32>
    %36 = arith.mulf %33, %35 : vector<8x512xf32>
    %c48 = arith.constant 48 : index
    %c0_18 = arith.constant 0 : index
    %37 = vector.load %arg7[%c48, %c0_18] : memref<80x512xf32, #tpu.memory_space<vmem>>, vector<8x512xf32>
    tpu.vector_store %arg7[%c48, %c0_18], %36 {strides = array<i32>} : memref<80x512xf32, #tpu.memory_space<vmem>>, vector<8x512xf32>,
    %c496_i32 = arith.constant 496 : i32
    %38 = tpu.dynamic_rotate %5 by %c496_i32 dim 1 : vector<8x512xf32>, i32 -> vector<8x512xf32>
    %c7 = arith.constant 7 : index
    %c0_19 = arith.constant 0 : index
    %39 = vector.load %arg2[%c7, %c0_19] : memref<9x512xf32, #tpu.memory_space<vmem>>, vector<1x512xf32>
    %40 = vector.broadcast %39 : vector<1x512xf32> to vector<8x512xf32>
    %41 = arith.mulf %38, %40 : vector<8x512xf32>
    %c56 = arith.constant 56 : index
    %c0_20 = arith.constant 0 : index
    %42 = vector.load %arg7[%c56, %c0_20] : memref<80x512xf32, #tpu.memory_space<vmem>>, vector<8x512xf32>
    tpu.vector_store %arg7[%c56, %c0_20], %41 {strides = array<i32>} : memref<80x512xf32, #tpu.memory_space<vmem>>, vector<8x512xf32>,
    %c495_i32 = arith.constant 495 : i32
    %43 = tpu.dynamic_rotate %5 by %c495_i32 dim 1 : vector<8x512xf32>, i32 -> vector<8x512xf32>
    %c8_21 = arith.constant 8 : index
    %c0_22 = arith.constant 0 : index
    %44 = vector.load %arg2[%c8_21, %c0_22] : memref<9x512xf32, #tpu.memory_space<vmem>>, vector<1x512xf32>
    %45 = vector.broadcast %44 : vector<1x512xf32> to vector<8x512xf32>
    %46 = arith.mulf %43, %45 : vector<8x512xf32>
    %c64 = arith.constant 64 : index
    %c0_23 = arith.constant 0 : index
    %47 = vector.load %arg7[%c64, %c0_23] : memref<80x512xf32, #tpu.memory_space<vmem>>, vector<8x512xf32>
    tpu.vector_store %arg7[%c64, %c0_23], %46 {strides = array<i32>} : memref<80x512xf32, #tpu.memory_space<vmem>>, vector<8x512xf32>,
    %cst_24 = arith.constant 1.000000e+00 : f32
    %48 = vector.broadcast %cst_24 : f32 to vector<8x512xf32>
    %c72 = arith.constant 72 : index
    %c0_25 = arith.constant 0 : index
    %49 = vector.load %arg7[%c72, %c0_25] : memref<80x512xf32, #tpu.memory_space<vmem>>, vector<8x512xf32>
    tpu.vector_store %arg7[%c72, %c0_25], %48 {strides = array<i32>} : memref<80x512xf32, #tpu.memory_space<vmem>>, vector<8x512xf32>,
    %c0_26 = arith.constant 0 : index
    %c0_27 = arith.constant 0 : index
    %50 = vector.load %arg4[%c0_26, %c0_27] : memref<8x80xbf16, #tpu.memory_space<vmem>>, vector<8x80xbf16>
    %c0_28 = arith.constant 0 : index
    %c0_29 = arith.constant 0 : index
    %51 = vector.load %arg7[%c0_28, %c0_29] : memref<80x512xf32, #tpu.memory_space<vmem>>, vector<80x512xf32>
    %52 = arith.truncf %51 : vector<80x512xf32> to vector<80x512xbf16>
    %cst_30 = arith.constant dense<0.000000e+00> : vector<8x512xf32>
    %53 = tpu.matmul %50, %52, %cst_30 {dimension_numbers = #tpu.dot_dimension_numbers<[1], [0], [0], [1], [0, 0, 1, 1], [], []>} : vector<8x80xbf16>, vector<80x512xbf16>, vector<8x512xf32> -> vector<8x512xf32>
    %cst_31 = arith.constant 0.000000e+00 : f32
    %54 = vector.broadcast %cst_31 : f32 to vector<8x512xf32>
    %55 = arith.maximumf %53, %54 : vector<8x512xf32>
    %c0_32 = arith.constant 0 : index
    %c0_33 = arith.constant 0 : index
    %56 = vector.load %arg5[%c0_32, %c0_33] : memref<16x8xbf16, #tpu.memory_space<vmem>>, vector<16x8xbf16>
    %57 = arith.truncf %55 : vector<8x512xf32> to vector<8x512xbf16>
    %cst_34 = arith.constant dense<0.000000e+00> : vector<16x512xf32>
    %58 = tpu.matmul %56, %57, %cst_34 {dimension_numbers = #tpu.dot_dimension_numbers<[1], [0], [0], [1], [0, 0, 1, 1], [], []>} : vector<16x8xbf16>, vector<8x512xbf16>, vector<16x512xf32> -> vector<16x512xf32>
    %59 = arith.addf %58, %6 : vector<16x512xf32>
    %cst_35 = arith.constant 0.000000e+00 : f32
    %60 = vector.broadcast %cst_35 : f32 to vector<16x512xf32>
    %61 = arith.maximumf %59, %60 : vector<16x512xf32>
    %c0_36 = arith.constant 0 : index
    %c0_37 = arith.constant 0 : index
    %62 = vector.load %arg6[%c0_36, %c0_37] : memref<16x512xf32, #tpu.memory_space<vmem>>, vector<16x512xf32>
    tpu.vector_store %arg6[%c0_36, %c0_37], %61 {strides = array<i32>} : memref<16x512xf32, #tpu.memory_space<vmem>>, vector<16x512xf32>,
    return
  }
  func.func @transform_0(%arg0: i32) -> (i32, i32) {
    %c0_i32 = arith.constant 0 : i32
    %c0_i32_0 = arith.constant 0 : i32
    return %c0_i32, %arg0 : i32, i32
  }
  func.func @transform_1(%arg0: i32) -> (i32, i32) {
    %c0_i32 = arith.constant 0 : i32
    %c0_i32_0 = arith.constant 0 : i32
    %c0_i32_1 = arith.constant 0 : i32
    return %c0_i32, %c0_i32_0 : i32, i32
  }
  func.func @transform_2(%arg0: i32) -> (i32, i32) {
    %c0_i32 = arith.constant 0 : i32
    %c0_i32_0 = arith.constant 0 : i32
    %c0_i32_1 = arith.constant 0 : i32
    return %c0_i32, %c0_i32_0 : i32, i32
  }
  func.func @transform_3(%arg0: i32) -> (i32, i32) {
    %c0_i32 = arith.constant 0 : i32
    %c0_i32_0 = arith.constant 0 : i32
    %c0_i32_1 = arith.constant 0 : i32
    return %c0_i32, %c0_i32_0 : i32, i32
  }
  func.func @transform_4(%arg0: i32) -> (i32, i32) {
    %c0_i32 = arith.constant 0 : i32
    %c0_i32_0 = arith.constant 0 : i32
    %c0_i32_1 = arith.constant 0 : i32
    return %c0_i32, %c0_i32_0 : i32, i32
  }
  func.func @transform_5(%arg0: i32) -> (i32, i32) {
    %c0_i32 = arith.constant 0 : i32
    %c0_i32_0 = arith.constant 0 : i32
    return %c0_i32, %arg0 : i32, i32
  }
}

</mosaic_0001>

<llo_original>
// kernel: tpu_custom_call.1
$region0: #{tpu_custom_call.1}
  #allocation0 [shape = 'u32[]', space=smem, size = 0x4, offset = 0x4, fixed_abs, tag = 'smem constant byte address 0x4 - core index']
  #allocation1 [shape = 'u32[144,128]{1,0:T(1,128)}', space=vmem, size = 0x12000, scoped, tag = 'internal scratch']
  #allocation2 [shape = 'f32[80,512]{1,0:T(8,128)}', space=vmem, size = 0x28000, scoped, tag = 'scratch operand']
  %s0 = inlined_call_operand.vmem [shape: bf16[5,512], index: 0, kind: input, shape index: {}]
  %s1 = inlined_call_operand.hbm [shape: f32[9,512], index: 1, kind: input, shape index: {}]
  %s2 = inlined_call_operand.vmem [shape: bf16[24,5], index: 2, kind: input, shape index: {}]
  %s3 = inlined_call_operand.vmem [shape: bf16[8,80], index: 3, kind: input, shape index: {}]
  %s4 = inlined_call_operand.vmem [shape: bf16[16,8], index: 4, kind: input, shape index: {}]
  %s5 = inlined_call_operand.hbm [shape: f32[16,512], index: 5, kind: output, shape index: {}]
  %s6 = sld [smem:[#allocation0]]
  $region34: #{tpu_custom_call.1} parent=0
    _
  %s8 = ssub.s32 1, %s6
  %s9 = scalar_select 0, %s8, %s6
  $region1: #{tpu_custom_call.1} parent=0
    #allocation3 [shape = 'u8[32768]{0}', space=vmem, size = 0x8000, scoped, tag = 'input window, operand 1, single buffered']
    #allocation4 [shape = 's32[1]{0}', space=sflag, size = 0x4, scoped, tag = 'scoped memory for tpu_custom_call.1']
    #allocation5 [shape = 's32[1]{0}', space=sflag, size = 0x4, scoped, tag = 'scoped memory for tpu_custom_call.1']
    #allocation6 [shape = 'u8[32768]{0}', space=vmem, size = 0x8000, scoped, tag = 'output window, operand 0, single buffered']
    %10 = vsyncpa [#allocation4], 0
    %11 = vsyncpa [#allocation5], 0
    // Predicated region
    $region2: #{tpu_custom_call.1} parent=1 // pred_check
      _
    $region3: #{tpu_custom_call.1} parent=1 // pred_check_branch
      %13 = sbr.rel (0) target = $region5
    $region4: #{tpu_custom_call.1} parent=1 // pred_region
      _
    $region5: #{tpu_custom_call.1} parent=1 // pred_fallthru
      _
    // Predicated region
    $region6: #{tpu_custom_call.1} parent=1 // pred_check
      _
    $region7: #{tpu_custom_call.1} parent=1 // pred_check_branch
      %15 = sbr.rel (0) target = $region9
    $region8: #{tpu_custom_call.1} parent=1 // pred_region
      %s17 = ssub.s32 1024, 1024
      %18 = vsyncadd [#allocation4], %s17
      %s19 = sshll.u32 [#allocation3], 4
      %s20 = int_to_ptr.vmem [resolvable:$true] %s19
      %25 = dma.hbm_to_vmem [thread:$0]  %s1, 1024, %s20, [#allocation4], 512, 512, 32
    $region9: #{tpu_custom_call.1} parent=1 // pred_fallthru
      _
    // Predicated region
    $region10: #{tpu_custom_call.1} parent=1 // pred_check
      _
    $region11: #{tpu_custom_call.1} parent=1 // pred_check_branch
      %27 = sbr.rel (0) target = $region13
    $region12: #{tpu_custom_call.1} parent=1 // pred_region
      _
    $region13: #{tpu_custom_call.1} parent=1 // pred_fallthru
      _
    // Predicated region
    $region14: #{tpu_custom_call.1} parent=1 // pred_check
      _
    $region15: #{tpu_custom_call.1} parent=1 // pred_check_branch
      %29 = sbr.rel (0) target = $region17
    $region16: #{tpu_custom_call.1} parent=1 // pred_region
      _
    $region17: #{tpu_custom_call.1} parent=1 // pred_fallthru
      _
    // Predicated region
    $region18: #{tpu_custom_call.1} parent=1 // pred_check
      _
    $region19: #{tpu_custom_call.1} parent=1 // pred_check_branch
      %31 = sbr.rel (0) target = $region21
    $region20: #{tpu_custom_call.1} parent=1 // pred_region
      _
    $region21: #{tpu_custom_call.1} parent=1 // pred_fallthru
      _
    // Predicated region
    $region22: #{tpu_custom_call.1} parent=1 // pred_check
      _
    $region23: #{tpu_custom_call.1} parent=1 // pred_check_branch
      %33 = sbr.rel (0) target = $region25
    $region24: #{tpu_custom_call.1} parent=1 // pred_region
      %34 = dma.done [#allocation4], 1024
    $region25: #{tpu_custom_call.1} parent=1 // pred_fallthru
      _
    %v36 = vld [vmem:[%s0] sm:$0x77]
    %v37 = vld [vmem:[%s0 + $0x8] sm:$0x77]
    %v38 = vld [vmem:[%s2] sm:$0xf]
    %v39 = vld [vmem:[%s2 + $0x4] sm:$0xf]
    %v40 = vld [vmem:[%s2 + $0x8] sm:$0xf]
    %v44 = vunpack.c.l.b16 %v38
    %v45 = vunpack.c.l.b16 %v39
    %v46 = vunpack.c.l.b16 %v40
    %v47 = vpack.c.b16 %v45, %v44
    %v48 = vpack.c.b16 %v46, %v46
    %v51 = vunpack.c.l.b16 %v36
    %v52 = vunpack.c.h.b16 %v36
    %v53 = vunpack.c.l.b16 %v37
    %v54 = vunpack.c.h.b16 %v37
    %v55 = vpack.c.b16 %v51, %v51
    %v56 = vpack.c.b16 %v52, %v52
    %v57 = vpack.c.b16 %v53, %v53
    %v58 = vpack.c.b16 %v54, %v54
    %vm59 = vcmask 39936
    %v61 = vsel %vm59, %v47, 0
    %v64 = vsel %vm59, %v48, 0
    %vm66 = vcmask 1041408
    %vm67 = vcmask 1042432
    %v68 = vsel %vm66, 4294967295, 65535
    %v69 = vsel %vm67, %v68, 0
    %v71 = vand.u32 %v55, %v69
    %v74 = vand.u32 %v56, %v69
    %v77 = vand.u32 %v57, %v69
    %v80 = vand.u32 %v58, %v69
    %82 = vmatprep.subr.bf16.mxu0 0
    %83 = vmatpush1.bf16.msra.mxu0 0
    %84 = vmatprep.subr.bf16.mxu0 0
    %85 = vmatpush1.bf16.msra.mxu0 0
    %86 = vmatprep.subr.bf16.mxu0 0
    %87 = vmatpush1.bf16.msra.mxu0 0
    %88 = vmatprep.subr.bf16.mxu0 0
    %89 = vmatpush1.bf16.msra.mxu0 0
    %90 = vmatprep.subr.bf16.mxu0 0
    %91 = vmatpush1.bf16.msra.mxu0 0
    %92 = vmatprep.subr.bf16.mxu0 0
    %93 = vmatpush1.bf16.msra.mxu0 0
    %94 = vmatprep.subr.bf16.mxu0 0
    %95 = vmatpush1.bf16.msra.mxu0 0
    %96 = vmatprep.subr.bf16.mxu0 %v74
    %97 = vmatpush1.bf16.msra.mxu0 %v71
    %98 = vmatprep.subr.bf16.mxu0 0
    %99 = vmatpush2.bf16.msra.mxu0 0
    %100 = vmatprep.subr.bf16.mxu0 0
    %101 = vmatpush2.bf16.msra.mxu0 0
    %102 = vmatprep.subr.bf16.mxu0 0
    %103 = vmatpush2.bf16.msra.mxu0 0
    %104 = vmatprep.subr.bf16.mxu0 0
    %105 = vmatpush2.bf16.msra.mxu0 0
    %106 = vmatprep.subr.bf16.mxu0 0
    %107 = vmatpush2.bf16.msra.mxu0 0
    %108 = vmatprep.subr.bf16.mxu0 0
    %109 = vmatpush2.bf16.msra.mxu0 0
    %110 = vmatprep.subr.bf16.mxu0 0
    %111 = vmatpush2.bf16.msra.mxu0 0
    %112 = vmatprep.subr.bf16.mxu0 0
    %113 = vmatpush2.bf16.msra.mxu0 0
    %114 = vmatprep.mubr.bf16.mxu0 0
    %115 = vmatmul.mubr.bf16.gmra.mxu0 %v61
    %v116 = vpop.f32.mrf.mxu0
    %v117 = vadd.f32 0.0, %v116
    %v118 = vpop.f32.mrf.mxu0
    %v119 = vadd.f32 0.0, %v118
    %v120 = vpop.f32.mrf.mxu0
    %v121 = vadd.f32 0.0, %v120
    %v122 = vpop.f32.mrf.mxu0
    %v123 = vadd.f32 0.0, %v122
    %124 = vmatprep.mubr.bf16.mxu0 0
    %125 = vmatmul.mubr.bf16.gmra.mxu0 %v64
    %v126 = vpop.f32.mrf.mxu0
    %v127 = vadd.f32 0.0, %v126
    %v128 = vpop.f32.mrf.mxu0
    %v129 = vadd.f32 0.0, %v128
    %v130 = vpop.f32.mrf.mxu0
    %v131 = vpop.f32.mrf.mxu0
    %132 = vdwg.mxu0
    %133 = vmatprep.subr.bf16.mxu0 0
    %134 = vmatpush1.bf16.msra.mxu0 0
    %135 = vmatprep.subr.bf16.mxu0 0
    %136 = vmatpush1.bf16.msra.mxu0 0
    %137 = vmatprep.subr.bf16.mxu0 0
    %138 = vmatpush1.bf16.msra.mxu0 0
    %139 = vmatprep.subr.bf16.mxu0 0
    %140 = vmatpush1.bf16.msra.mxu0 0
    %141 = vmatprep.subr.bf16.mxu0 0
    %142 = vmatpush1.bf16.msra.mxu0 0
    %143 = vmatprep.subr.bf16.mxu0 0
    %144 = vmatpush1.bf16.msra.mxu0 0
    %145 = vmatprep.subr.bf16.mxu0 0
    %146 = vmatpush1.bf16.msra.mxu0 0
    %147 = vmatprep.subr.bf16.mxu0 %v80
    %148 = vmatpush1.bf16.msra.mxu0 %v77
    %149 = vmatprep.subr.bf16.mxu0 0
    %150 = vmatpush2.bf16.msra.mxu0 0
    %151 = vmatprep.subr.bf16.mxu0 0
    %152 = vmatpush2.bf16.msra.mxu0 0
    %153 = vmatprep.subr.bf16.mxu0 0
    %154 = vmatpush2.bf16.msra.mxu0 0
    %155 = vmatprep.subr.bf16.mxu0 0
    %156 = vmatpush2.bf16.msra.mxu0 0
    %157 = vmatprep.subr.bf16.mxu0 0
    %158 = vmatpush2.bf16.msra.mxu0 0
    %159 = vmatprep.subr.bf16.mxu0 0
    %160 = vmatpush2.bf16.msra.mxu0 0
    %161 = vmatprep.subr.bf16.mxu0 0
    %162 = vmatpush2.bf16.msra.mxu0 0
    %163 = vmatprep.subr.bf16.mxu0 0
    %164 = vmatpush2.bf16.msra.mxu0 0
    %165 = vmatprep.mubr.bf16.mxu0 0
    %166 = vmatmul.mubr.bf16.gmra.mxu0 %v61
    %v167 = vpop.f32.mrf.mxu0
    %v168 = vadd.f32 0.0, %v167
    %v169 = vpop.f32.mrf.mxu0
    %v170 = vadd.f32 0.0, %v169
    %v171 = vpop.f32.mrf.mxu0
    %v172 = vadd.f32 0.0, %v171
    %v173 = vpop.f32.mrf.mxu0
    %v174 = vadd.f32 0.0, %v173
    %175 = vmatprep.mubr.bf16.mxu0 0
    %176 = vmatmul.mubr.bf16.gmra.mxu0 %v64
    %v177 = vpop.f32.mrf.mxu0
    %v178 = vadd.f32 0.0, %v177
    %v179 = vpop.f32.mrf.mxu0
    %v180 = vadd.f32 0.0, %v179
    %v181 = vpop.f32.mrf.mxu0
    %v182 = vpop.f32.mrf.mxu0
    %183 = vdwg.mxu0
    %v184 = vmax.f32 %v117, 0.0
    %v185 = vmax.f32 %v119, 0.0
    %v186 = vmax.f32 %v168, 0.0
    %v187 = vmax.f32 %v170, 0.0
    %188 = vrot.lane.b32.xlu0 %v184, 17
    %v189 = vpop.permute.xlu0 %188
    %190 = vrot.lane.b32.xlu0 %v185, 17
    %v191 = vpop.permute.xlu0 %190
    %192 = vrot.lane.b32.xlu0 %v186, 17
    %v193 = vpop.permute.xlu0 %192
    %194 = vrot.lane.b32.xlu0 %v187, 17
    %v195 = vpop.permute.xlu0 %194
    %v196 = vlaneseq
    %v197 = vand.u32 %v196, 127
    %vm198 = vcmp.lt.s32.totalorder %v197, 17
    %v199 = vsel %vm198, %v193, %v195
    %v200 = vsel %vm198, %v191, %v193
    %v201 = vsel %vm198, %v189, %v191
    %v202 = vsel %vm198, %v195, %v189
    %v203 = vld [vmem:[#allocation3] ss:$8 sm:$0xf]
    %v205 = vlaneseq
    %v206 = vshrl.u32 %v205, 7
    %v207 = vsub.s32 0, %v206
    %v208 = vrot.slane %v203, %v207
    %v209 = vlaneseq
    %v210 = vshrl.u32 %v209, 7
    %v211 = vsub.s32 1, %v210
    %v212 = vrot.slane %v203, %v211
    %v213 = vlaneseq
    %v214 = vshrl.u32 %v213, 7
    %v215 = vsub.s32 2, %v214
    %v216 = vrot.slane %v203, %v215
    %v217 = vlaneseq
    %v218 = vshrl.u32 %v217, 7
    %v219 = vsub.s32 3, %v218
    %v220 = vrot.slane %v203, %v219
    %v225 = vmul.f32 %v202, %v208
    %v226 = vmul.f32 %v201, %v212
    %v227 = vmul.f32 %v200, %v216
    %v228 = vmul.f32 %v199, %v220
    %229 = vst [vmem:[#allocation2] sm:$0xff] %v225
    %230 = vst [vmem:[#allocation2 + $0x8] sm:$0xff] %v226
    %231 = vst [vmem:[#allocation2 + $0x10] sm:$0xff] %v227
    %232 = vst [vmem:[#allocation2 + $0x18] sm:$0xff] %v228
    %233 = vrot.lane.b32.xlu0 %v184, 16
    %v234 = vpop.permute.xlu0 %233
    %235 = vrot.lane.b32.xlu0 %v185, 16
    %v236 = vpop.permute.xlu0 %235
    %237 = vrot.lane.b32.xlu0 %v186, 16
    %v238 = vpop.permute.xlu0 %237
    %239 = vrot.lane.b32.xlu0 %v187, 16
    %v240 = vpop.permute.xlu0 %239
    %vm241 = vcmp.lt.s32.totalorder %v197, 16
    %v242 = vsel %vm241, %v238, %v240
    %v243 = vsel %vm241, %v236, %v238
    %v244 = vsel %vm241, %v234, %v236
    %v245 = vsel %vm241, %v240, %v234
    %s246 = scalar_lea.vmem [#allocation3], 1
    %v247 = vld [vmem:[%s246] ss:$8 sm:$0xf]
    %v249 = vlaneseq
    %v250 = vshrl.u32 %v249, 7
    %v251 = vsub.s32 0, %v250
    %v252 = vrot.slane %v247, %v251
    %v253 = vlaneseq
    %v254 = vshrl.u32 %v253, 7
    %v255 = vsub.s32 1, %v254
    %v256 = vrot.slane %v247, %v255
    %v257 = vlaneseq
    %v258 = vshrl.u32 %v257, 7
    %v259 = vsub.s32 2, %v258
    %v260 = vrot.slane %v247, %v259
    %v261 = vlaneseq
    %v262 = vshrl.u32 %v261, 7
    %v263 = vsub.s32 3, %v262
    %v264 = vrot.slane %v247, %v263
    %v269 = vmul.f32 %v245, %v252
    %v270 = vmul.f32 %v244, %v256
    %v271 = vmul.f32 %v243, %v260
    %v272 = vmul.f32 %v242, %v264
    %273 = vst [vmem:[#allocation2 + $0x20] sm:$0xff] %v269
    %274 = vst [vmem:[#allocation2 + $0x28] sm:$0xff] %v270
    %275 = vst [vmem:[#allocation2 + $0x30] sm:$0xff] %v271
    %276 = vst [vmem:[#allocation2 + $0x38] sm:$0xff] %v272
    %277 = vrot.lane.b32.xlu0 %v184, 15
    %v278 = vpop.permute.xlu0 %277
    %279 = vrot.lane.b32.xlu0 %v185, 15
    %v280 = vpop.permute.xlu0 %279
    %281 = vrot.lane.b32.xlu0 %v186, 15
    %v282 = vpop.permute.xlu0 %281
    %283 = vrot.lane.b32.xlu0 %v187, 15
    %v284 = vpop.permute.xlu0 %283
    %vm285 = vcmp.lt.s32.totalorder %v197, 15
    %v286 = vsel %vm285, %v282, %v284
    %v287 = vsel %vm285, %v280, %v282
    %v288 = vsel %vm285, %v278, %v280
    %v289 = vsel %vm285, %v284, %v278
    %s290 = scalar_lea.vmem [#allocation3], 2
    %v291 = vld [vmem:[%s290] ss:$8 sm:$0xf]
    %v293 = vlaneseq
    %v294 = vshrl.u32 %v293, 7
    %v295 = vsub.s32 0, %v294
    %v296 = vrot.slane %v291, %v295
    %v297 = vlaneseq
    %v298 = vshrl.u32 %v297, 7
    %v299 = vsub.s32 1, %v298
    %v300 = vrot.slane %v291, %v299
    %v301 = vlaneseq
    %v302 = vshrl.u32 %v301, 7
    %v303 = vsub.s32 2, %v302
    %v304 = vrot.slane %v291, %v303
    %v305 = vlaneseq
    %v306 = vshrl.u32 %v305, 7
    %v307 = vsub.s32 3, %v306
    %v308 = vrot.slane %v291, %v307
    %v313 = vmul.f32 %v289, %v296
    %v314 = vmul.f32 %v288, %v300
    %v315 = vmul.f32 %v287, %v304
    %v316 = vmul.f32 %v286, %v308
    %317 = vst [vmem:[#allocation2 + $0x40] sm:$0xff] %v313
    %318 = vst [vmem:[#allocation2 + $0x48] sm:$0xff] %v314
    %319 = vst [vmem:[#allocation2 + $0x50] sm:$0xff] %v315
    %320 = vst [vmem:[#allocation2 + $0x58] sm:$0xff] %v316
    %321 = vrot.lane.b32.xlu0 %v184, 1
    %v322 = vpop.permute.xlu0 %321
    %323 = vrot.lane.b32.xlu0 %v185, 1
    %v324 = vpop.permute.xlu0 %323
    %325 = vrot.lane.b32.xlu0 %v186, 1
    %v326 = vpop.permute.xlu0 %325
    %327 = vrot.lane.b32.xlu0 %v187, 1
    %v328 = vpop.permute.xlu0 %327
    %vm329 = vcmp.lt.s32.totalorder %v197, 1
    %v330 = vsel %vm329, %v326, %v328
    %v331 = vsel %vm329, %v324, %v326
    %v332 = vsel %vm329, %v322, %v324
    %v333 = vsel %vm329, %v328, %v322
    %s334 = scalar_lea.vmem [#allocation3], 3
    %v335 = vld [vmem:[%s334] ss:$8 sm:$0xf]
    %v337 = vlaneseq
    %v338 = vshrl.u32 %v337, 7
    %v339 = vsub.s32 0, %v338
    %v340 = vrot.slane %v335, %v339
    %v341 = vlaneseq
    %v342 = vshrl.u32 %v341, 7
    %v343 = vsub.s32 1, %v342
    %v344 = vrot.slane %v335, %v343
    %v345 = vlaneseq
    %v346 = vshrl.u32 %v345, 7
    %v347 = vsub.s32 2, %v346
    %v348 = vrot.slane %v335, %v347
    %v349 = vlaneseq
    %v350 = vshrl.u32 %v349, 7
    %v351 = vsub.s32 3, %v350
    %v352 = vrot.slane %v335, %v351
    %v357 = vmul.f32 %v333, %v340
    %v358 = vmul.f32 %v332, %v344
    %v359 = vmul.f32 %v331, %v348
    %v360 = vmul.f32 %v330, %v352
    %361 = vst [vmem:[#allocation2 + $0x60] sm:$0xff] %v357
    %362 = vst [vmem:[#allocation2 + $0x68] sm:$0xff] %v358
    %363 = vst [vmem:[#allocation2 + $0x70] sm:$0xff] %v359
    %364 = vst [vmem:[#allocation2 + $0x78] sm:$0xff] %v360
    %365 = vst [vmem:[#allocation2 + $0x80] sm:$0xff] %v184
    %366 = vst [vmem:[#allocation2 + $0x88] sm:$0xff] %v185
    %367 = vst [vmem:[#allocation2 + $0x90] sm:$0xff] %v186
    %368 = vst [vmem:[#allocation2 + $0x98] sm:$0xff] %v187
    %369 = vrot.lane.b32.xlu0 %v184, 127
    %v370 = vpop.permute.xlu0 %369
    %371 = vrot.lane.b32.xlu0 %v185, 127
    %v372 = vpop.permute.xlu0 %371
    %373 = vrot.lane.b32.xlu0 %v186, 127
    %v374 = vpop.permute.xlu0 %373
    %375 = vrot.lane.b32.xlu0 %v187, 127
    %v376 = vpop.permute.xlu0 %375
    %vm377 = vcmp.lt.s32.totalorder %v197, 127
    %v378 = vsel %vm377, %v374, %v376
    %v379 = vsel %vm377, %v372, %v374
    %v380 = vsel %vm377, %v370, %v372
    %v381 = vsel %vm377, %v376, %v370
    %s382 = scalar_lea.vmem [#allocation3], 5
    %v383 = vld [vmem:[%s382] ss:$8 sm:$0xf]
    %v385 = vlaneseq
    %v386 = vshrl.u32 %v385, 7
    %v387 = vsub.s32 0, %v386
    %v388 = vrot.slane %v383, %v387
    %v389 = vlaneseq
    %v390 = vshrl.u32 %v389, 7
    %v391 = vsub.s32 1, %v390
    %v392 = vrot.slane %v383, %v391
    %v393 = vlaneseq
    %v394 = vshrl.u32 %v393, 7
    %v395 = vsub.s32 2, %v394
    %v396 = vrot.slane %v383, %v395
    %v397 = vlaneseq
    %v398 = vshrl.u32 %v397, 7
    %v399 = vsub.s32 3, %v398
    %v400 = vrot.slane %v383, %v399
    %v405 = vmul.f32 %v380, %v388
    %v406 = vmul.f32 %v379, %v392
    %v407 = vmul.f32 %v378, %v396
    %v408 = vmul.f32 %v381, %v400
    %409 = vst [vmem:[#allocation2 + $0xa0] sm:$0xff] %v405
    %410 = vst [vmem:[#allocation2 + $0xa8] sm:$0xff] %v406
    %411 = vst [vmem:[#allocation2 + $0xb0] sm:$0xff] %v407
    %412 = vst [vmem:[#allocation2 + $0xb8] sm:$0xff] %v408
    %413 = vrot.lane.b32.xlu0 %v184, 113
    %v414 = vpop.permute.xlu0 %413
    %415 = vrot.lane.b32.xlu0 %v185, 113
    %v416 = vpop.permute.xlu0 %415
    %417 = vrot.lane.b32.xlu0 %v186, 113
    %v418 = vpop.permute.xlu0 %417
    %419 = vrot.lane.b32.xlu0 %v187, 113
    %v420 = vpop.permute.xlu0 %419
    %vm421 = vcmp.lt.s32.totalorder %v197, 113
    %v422 = vsel %vm421, %v418, %v420
    %v423 = vsel %vm421, %v416, %v418
    %v424 = vsel %vm421, %v414, %v416
    %v425 = vsel %vm421, %v420, %v414
    %s426 = scalar_lea.vmem [#allocation3], 6
    %v427 = vld [vmem:[%s426] ss:$8 sm:$0xf]
    %v429 = vlaneseq
    %v430 = vshrl.u32 %v429, 7
    %v431 = vsub.s32 0, %v430
    %v432 = vrot.slane %v427, %v431
    %v433 = vlaneseq
    %v434 = vshrl.u32 %v433, 7
    %v435 = vsub.s32 1, %v434
    %v436 = vrot.slane %v427, %v435
    %v437 = vlaneseq
    %v438 = vshrl.u32 %v437, 7
    %v439 = vsub.s32 2, %v438
    %v440 = vrot.slane %v427, %v439
    %v441 = vlaneseq
    %v442 = vshrl.u32 %v441, 7
    %v443 = vsub.s32 3, %v442
    %v444 = vrot.slane %v427, %v443
    %v449 = vmul.f32 %v424, %v432
    %v450 = vmul.f32 %v423, %v436
    %v451 = vmul.f32 %v422, %v440
    %v452 = vmul.f32 %v425, %v444
    %453 = vst [vmem:[#allocation2 + $0xc0] sm:$0xff] %v449
    %454 = vst [vmem:[#allocation2 + $0xc8] sm:$0xff] %v450
    %455 = vst [vmem:[#allocation2 + $0xd0] sm:$0xff] %v451
    %456 = vst [vmem:[#allocation2 + $0xd8] sm:$0xff] %v452
    %457 = vrot.lane.b32.xlu0 %v184, 112
    %v458 = vpop.permute.xlu0 %457
    %459 = vrot.lane.b32.xlu0 %v185, 112
    %v460 = vpop.permute.xlu0 %459
    %461 = vrot.lane.b32.xlu0 %v186, 112
    %v462 = vpop.permute.xlu0 %461
    %463 = vrot.lane.b32.xlu0 %v187, 112
    %v464 = vpop.permute.xlu0 %463
    %vm465 = vcmp.lt.s32.totalorder %v197, 112
    %v466 = vsel %vm465, %v462, %v464
    %v467 = vsel %vm465, %v460, %v462
    %v468 = vsel %vm465, %v458, %v460
    %v469 = vsel %vm465, %v464, %v458
    %s470 = scalar_lea.vmem [#allocation3], 7
    %v471 = vld [vmem:[%s470] ss:$8 sm:$0xf]
    %v473 = vlaneseq
    %v474 = vshrl.u32 %v473, 7
    %v475 = vsub.s32 0, %v474
    %v476 = vrot.slane %v471, %v475
    %v477 = vlaneseq
    %v478 = vshrl.u32 %v477, 7
    %v479 = vsub.s32 1, %v478
    %v480 = vrot.slane %v471, %v479
    %v481 = vlaneseq
    %v482 = vshrl.u32 %v481, 7
    %v483 = vsub.s32 2, %v482
    %v484 = vrot.slane %v471, %v483
    %v485 = vlaneseq
    %v486 = vshrl.u32 %v485, 7
    %v487 = vsub.s32 3, %v486
    %v488 = vrot.slane %v471, %v487
    %v493 = vmul.f32 %v468, %v476
    %v494 = vmul.f32 %v467, %v480
    %v495 = vmul.f32 %v466, %v484
    %v496 = vmul.f32 %v469, %v488
    %497 = vst [vmem:[#allocation2 + $0xe0] sm:$0xff] %v493
    %498 = vst [vmem:[#allocation2 + $0xe8] sm:$0xff] %v494
    %499 = vst [vmem:[#allocation2 + $0xf0] sm:$0xff] %v495
    %500 = vst [vmem:[#allocation2 + $0xf8] sm:$0xff] %v496
    %501 = vrot.lane.b32.xlu0 %v184, 111
    %v502 = vpop.permute.xlu0 %501
    %503 = vrot.lane.b32.xlu0 %v185, 111
    %v504 = vpop.permute.xlu0 %503
    %505 = vrot.lane.b32.xlu0 %v186, 111
    %v506 = vpop.permute.xlu0 %505
    %507 = vrot.lane.b32.xlu0 %v187, 111
    %v508 = vpop.permute.xlu0 %507
    %vm509 = vcmp.lt.s32.totalorder %v197, 111
    %v510 = vsel %vm509, %v506, %v508
    %v511 = vsel %vm509, %v504, %v506
    %v512 = vsel %vm509, %v502, %v504
    %v513 = vsel %vm509, %v508, %v502
    %s514 = scalar_lea.vmem [#allocation3], 32
    %v515 = vld [vmem:[%s514] ss:$8 sm:$0xf]
    %v517 = vlaneseq
    %v518 = vshrl.u32 %v517, 7
    %v519 = vsub.s32 0, %v518
    %v520 = vrot.slane %v515, %v519
    %v521 = vlaneseq
    %v522 = vshrl.u32 %v521, 7
    %v523 = vsub.s32 1, %v522
    %v524 = vrot.slane %v515, %v523
    %v525 = vlaneseq
    %v526 = vshrl.u32 %v525, 7
    %v527 = vsub.s32 2, %v526
    %v528 = vrot.slane %v515, %v527
    %v529 = vlaneseq
    %v530 = vshrl.u32 %v529, 7
    %v531 = vsub.s32 3, %v530
    %v532 = vrot.slane %v515, %v531
    %v537 = vmul.f32 %v512, %v520
    %v538 = vmul.f32 %v511, %v524
    %v539 = vmul.f32 %v510, %v528
    %v540 = vmul.f32 %v513, %v532
    %541 = vst [vmem:[#allocation2 + $0x100] sm:$0xff] %v537
    %542 = vst [vmem:[#allocation2 + $0x108] sm:$0xff] %v538
    %543 = vst [vmem:[#allocation2 + $0x110] sm:$0xff] %v539
    %544 = vst [vmem:[#allocation2 + $0x118] sm:$0xff] %v540
    %545 = vst [vmem:[#allocation2 + $0x120] sm:$0xff] 1.0
    %546 = vst [vmem:[#allocation2 + $0x128] sm:$0xff] 1.0
    %547 = vst [vmem:[#allocation2 + $0x130] sm:$0xff] 1.0
    %548 = vst [vmem:[#allocation2 + $0x138] sm:$0xff] 1.0
    %v549 = vld [vmem:[%s3] sm:$0xf]
    %v550 = vld [vmem:[#allocation2] sm:$0xff]
    %v551 = vld [vmem:[#allocation2 + $0x8] sm:$0xff]
    %v552 = vld [vmem:[#allocation2 + $0x10] sm:$0xff]
    %v553 = vld [vmem:[#allocation2 + $0x18] sm:$0xff]
    %v554 = vld [vmem:[#allocation2 + $0x20] sm:$0xff]
    %v555 = vld [vmem:[#allocation2 + $0x28] sm:$0xff]
    %v556 = vld [vmem:[#allocation2 + $0x30] sm:$0xff]
    %v557 = vld [vmem:[#allocation2 + $0x38] sm:$0xff]
    %v558 = vld [vmem:[#allocation2 + $0x40] sm:$0xff]
    %v559 = vld [vmem:[#allocation2 + $0x48] sm:$0xff]
    %v560 = vld [vmem:[#allocation2 + $0x50] sm:$0xff]
    %v561 = vld [vmem:[#allocation2 + $0x58] sm:$0xff]
    %v562 = vld [vmem:[#allocation2 + $0x60] sm:$0xff]
    %v563 = vld [vmem:[#allocation2 + $0x68] sm:$0xff]
    %v564 = vld [vmem:[#allocation2 + $0x70] sm:$0xff]
    %v565 = vld [vmem:[#allocation2 + $0x78] sm:$0xff]
    %v566 = vld [vmem:[#allocation2 + $0x80] sm:$0xff]
    %v567 = vld [vmem:[#allocation2 + $0x88] sm:$0xff]
    %v568 = vld [vmem:[#allocation2 + $0x90] sm:$0xff]
    %v569 = vld [vmem:[#allocation2 + $0x98] sm:$0xff]
    %v570 = vld [vmem:[#allocation2 + $0xa0] sm:$0xff]
    %v571 = vld [vmem:[#allocation2 + $0xa8] sm:$0xff]
    %v572 = vld [vmem:[#allocation2 + $0xb0] sm:$0xff]
    %v573 = vld [vmem:[#allocation2 + $0xb8] sm:$0xff]
    %v574 = vld [vmem:[#allocation2 + $0xc0] sm:$0xff]
    %v575 = vld [vmem:[#allocation2 + $0xc8] sm:$0xff]
    %v576 = vld [vmem:[#allocation2 + $0xd0] sm:$0xff]
    %v577 = vld [vmem:[#allocation2 + $0xd8] sm:$0xff]
    %v578 = vld [vmem:[#allocation2 + $0xe0] sm:$0xff]
    %v579 = vld [vmem:[#allocation2 + $0xe8] sm:$0xff]
    %v580 = vld [vmem:[#allocation2 + $0xf0] sm:$0xff]
    %v581 = vld [vmem:[#allocation2 + $0xf8] sm:$0xff]
    %v582 = vld [vmem:[#allocation2 + $0x100] sm:$0xff]
    %v583 = vld [vmem:[#allocation2 + $0x108] sm:$0xff]
    %v584 = vld [vmem:[#allocation2 + $0x110] sm:$0xff]
    %v585 = vld [vmem:[#allocation2 + $0x118] sm:$0xff]
    %v586 = vld [vmem:[#allocation2 + $0x120] sm:$0xff]
    %v587 = vld [vmem:[#allocation2 + $0x128] sm:$0xff]
    %v588 = vld [vmem:[#allocation2 + $0x130] sm:$0xff]
    %v589 = vld [vmem:[#allocation2 + $0x138] sm:$0xff]
    %v590 = vpack.c.bf16 %v554, %v550
    %v591 = vpack.c.bf16 %v555, %v551
    %v592 = vpack.c.bf16 %v556, %v552
    %v593 = vpack.c.bf16 %v557, %v553
    %v594 = vpack.c.bf16 %v562, %v558
    %v595 = vpack.c.bf16 %v563, %v559
    %v596 = vpack.c.bf16 %v564, %v560
    %v597 = vpack.c.bf16 %v565, %v561
    %v598 = vpack.c.bf16 %v570, %v566
    %v599 = vpack.c.bf16 %v571, %v567
    %v600 = vpack.c.bf16 %v572, %v568
    %v601 = vpack.c.bf16 %v573, %v569
    %v602 = vpack.c.bf16 %v578, %v574
    %v603 = vpack.c.bf16 %v579, %v575
    %v604 = vpack.c.bf16 %v580, %v576
    %v605 = vpack.c.bf16 %v581, %v577
    %v606 = vpack.c.bf16 %v586, %v582
    %v607 = vpack.c.bf16 %v587, %v583
    %v608 = vpack.c.bf16 %v588, %v584
    %v609 = vpack.c.bf16 %v589, %v585
    %vm610 = vcmask 654336
    %v612 = vsel %vm610, %v549, 0
    %614 = vmatprep.subr.bf16.mxu0 0
    %615 = vmatpush1.bf16.msra.mxu0 0
    %616 = vmatprep.subr.bf16.mxu0 0
    %617 = vmatpush1.bf16.msra.mxu0 0
    %618 = vmatprep.subr.bf16.mxu0 0
    %619 = vmatpush1.bf16.msra.mxu0 0
    %620 = vmatprep.subr.bf16.mxu0 %v607
    %621 = vmatpush1.bf16.msra.mxu0 %v606
    %622 = vmatprep.subr.bf16.mxu0 %v603
    %623 = vmatpush1.bf16.msra.mxu0 %v602
    %624 = vmatprep.subr.bf16.mxu0 %v599
    %625 = vmatpush1.bf16.msra.mxu0 %v598
    %626 = vmatprep.subr.bf16.mxu0 %v595
    %627 = vmatpush1.bf16.msra.mxu0 %v594
    %628 = vmatprep.subr.bf16.mxu0 %v591
    %629 = vmatpush1.bf16.msra.mxu0 %v590
    %630 = vmatprep.subr.bf16.mxu0 0
    %631 = vmatpush2.bf16.msra.mxu0 0
    %632 = vmatprep.subr.bf16.mxu0 0
    %633 = vmatpush2.bf16.msra.mxu0 0
    %634 = vmatprep.subr.bf16.mxu0 0
    %635 = vmatpush2.bf16.msra.mxu0 0
    %636 = vmatprep.subr.bf16.mxu0 0
    %637 = vmatpush2.bf16.msra.mxu0 0
    %638 = vmatprep.subr.bf16.mxu0 0
    %639 = vmatpush2.bf16.msra.mxu0 0
    %640 = vmatprep.subr.bf16.mxu0 0
    %641 = vmatpush2.bf16.msra.mxu0 0
    %642 = vmatprep.subr.bf16.mxu0 0
    %643 = vmatpush2.bf16.msra.mxu0 0
    %644 = vmatprep.subr.bf16.mxu0 0
    %645 = vmatpush2.bf16.msra.mxu0 0
    %646 = vmatprep.mubr.bf16.mxu0 0
    %647 = vmatmul.mubr.bf16.gmra.mxu0 %v612
    %v648 = vpop.f32.mrf.mxu0
    %v649 = vadd.f32 0.0, %v648
    %v650 = vpop.f32.mrf.mxu0
    %v651 = vadd.f32 0.0, %v650
    %v652 = vpop.f32.mrf.mxu0
    %v653 = vpop.f32.mrf.mxu0
    %654 = vdwg.mxu0
    %655 = vmatprep.subr.bf16.mxu0 0
    %656 = vmatpush1.bf16.msra.mxu0 0
    %657 = vmatprep.subr.bf16.mxu0 0
    %658 = vmatpush1.bf16.msra.mxu0 0
    %659 = vmatprep.subr.bf16.mxu0 0
    %660 = vmatpush1.bf16.msra.mxu0 0
    %661 = vmatprep.subr.bf16.mxu0 %v609
    %662 = vmatpush1.bf16.msra.mxu0 %v608
    %663 = vmatprep.subr.bf16.mxu0 %v605
    %664 = vmatpush1.bf16.msra.mxu0 %v604
    %665 = vmatprep.subr.bf16.mxu0 %v601
    %666 = vmatpush1.bf16.msra.mxu0 %v600
    %667 = vmatprep.subr.bf16.mxu0 %v597
    %668 = vmatpush1.bf16.msra.mxu0 %v596
    %669 = vmatprep.subr.bf16.mxu0 %v593
    %670 = vmatpush1.bf16.msra.mxu0 %v592
    %671 = vmatprep.subr.bf16.mxu0 0
    %672 = vmatpush2.bf16.msra.mxu0 0
    %673 = vmatprep.subr.bf16.mxu0 0
    %674 = vmatpush2.bf16.msra.mxu0 0
    %675 = vmatprep.subr.bf16.mxu0 0
    %676 = vmatpush2.bf16.msra.mxu0 0
    %677 = vmatprep.subr.bf16.mxu0 0
    %678 = vmatpush2.bf16.msra.mxu0 0
    %679 = vmatprep.subr.bf16.mxu0 0
    %680 = vmatpush2.bf16.msra.mxu0 0
    %681 = vmatprep.subr.bf16.mxu0 0
    %682 = vmatpush2.bf16.msra.mxu0 0
    %683 = vmatprep.subr.bf16.mxu0 0
    %684 = vmatpush2.bf16.msra.mxu0 0
    %685 = vmatprep.subr.bf16.mxu0 0
    %686 = vmatpush2.bf16.msra.mxu0 0
    %687 = vmatprep.mubr.bf16.mxu0 0
    %688 = vmatmul.mubr.bf16.gmra.mxu0 %v612
    %v689 = vpop.f32.mrf.mxu0
    %v690 = vadd.f32 0.0, %v689
    %v691 = vpop.f32.mrf.mxu0
    %v692 = vadd.f32 0.0, %v691
    %v693 = vpop.f32.mrf.mxu0
    %v694 = vpop.f32.mrf.mxu0
    %695 = vdwg.mxu0
    %v696 = vmax.f32 %v649, 0.0
    %v697 = vmax.f32 %v651, 0.0
    %v698 = vmax.f32 %v690, 0.0
    %v699 = vmax.f32 %v692, 0.0
    %v700 = vld [vmem:[%s4] sm:$0xf]
    %v701 = vld [vmem:[%s4 + $0x4] sm:$0xf]
    %v702 = vpack.c.bf16 %v696, %v696
    %v703 = vpack.c.bf16 %v697, %v697
    %v704 = vpack.c.bf16 %v698, %v698
    %v705 = vpack.c.bf16 %v699, %v699
    %v708 = vunpack.c.l.b16 %v700
    %v709 = vunpack.c.l.b16 %v701
    %v710 = vpack.c.b16 %v709, %v708
    %vm711 = vcmask 64512
    %v713 = vsel %vm711, %v710, 0
    %vm715 = vcmask 1043456
    %v717 = vsel %vm715, %v702, 0
    %v720 = vsel %vm715, %v703, 0
    %v723 = vsel %vm715, %v704, 0
    %v726 = vsel %vm715, %v705, 0
    %728 = vmatprep.subr.bf16.mxu0 0
    %729 = vmatpush1.bf16.msra.mxu0 0
    %730 = vmatprep.subr.bf16.mxu0 0
    %731 = vmatpush1.bf16.msra.mxu0 0
    %732 = vmatprep.subr.bf16.mxu0 0
    %733 = vmatpush1.bf16.msra.mxu0 0
    %734 = vmatprep.subr.bf16.mxu0 0
    %735 = vmatpush1.bf16.msra.mxu0 0
    %736 = vmatprep.subr.bf16.mxu0 0
    %737 = vmatpush1.bf16.msra.mxu0 0
    %738 = vmatprep.subr.bf16.mxu0 0
    %739 = vmatpush1.bf16.msra.mxu0 0
    %740 = vmatprep.subr.bf16.mxu0 0
    %741 = vmatpush1.bf16.msra.mxu0 0
    %742 = vmatprep.subr.bf16.mxu0 %v720
    %743 = vmatpush1.bf16.msra.mxu0 %v717
    %744 = vmatprep.subr.bf16.mxu0 0
    %745 = vmatpush2.bf16.msra.mxu0 0
    %746 = vmatprep.subr.bf16.mxu0 0
    %747 = vmatpush2.bf16.msra.mxu0 0
    %748 = vmatprep.subr.bf16.mxu0 0
    %749 = vmatpush2.bf16.msra.mxu0 0
    %750 = vmatprep.subr.bf16.mxu0 0
    %751 = vmatpush2.bf16.msra.mxu0 0
    %752 = vmatprep.subr.bf16.mxu0 0
    %753 = vmatpush2.bf16.msra.mxu0 0
    %754 = vmatprep.subr.bf16.mxu0 0
    %755 = vmatpush2.bf16.msra.mxu0 0
    %756 = vmatprep.subr.bf16.mxu0 0
    %757 = vmatpush2.bf16.msra.mxu0 0
    %758 = vmatprep.subr.bf16.mxu0 0
    %759 = vmatpush2.bf16.msra.mxu0 0
    %760 = vmatprep.mubr.bf16.mxu0 0
    %761 = vmatmul.mubr.bf16.gmra.mxu0 %v713
    %v762 = vpop.f32.mrf.mxu0
    %v763 = vadd.f32 %v121, %v762
    %v764 = vpop.f32.mrf.mxu0
    %v765 = vadd.f32 %v123, %v764
    %v766 = vpop.f32.mrf.mxu0
    %v767 = vadd.f32 %v127, %v766
    %v768 = vpop.f32.mrf.mxu0
    %v769 = vadd.f32 %v129, %v768
    %770 = vdwg.mxu0
    %771 = vmatprep.subr.bf16.mxu0 0
    %772 = vmatpush1.bf16.msra.mxu0 0
    %773 = vmatprep.subr.bf16.mxu0 0
    %774 = vmatpush1.bf16.msra.mxu0 0
    %775 = vmatprep.subr.bf16.mxu0 0
    %776 = vmatpush1.bf16.msra.mxu0 0
    %777 = vmatprep.subr.bf16.mxu0 0
    %778 = vmatpush1.bf16.msra.mxu0 0
    %779 = vmatprep.subr.bf16.mxu0 0
    %780 = vmatpush1.bf16.msra.mxu0 0
    %781 = vmatprep.subr.bf16.mxu0 0
    %782 = vmatpush1.bf16.msra.mxu0 0
    %783 = vmatprep.subr.bf16.mxu0 0
    %784 = vmatpush1.bf16.msra.mxu0 0
    %785 = vmatprep.subr.bf16.mxu0 %v726
    %786 = vmatpush1.bf16.msra.mxu0 %v723
    %787 = vmatprep.subr.bf16.mxu0 0
    %788 = vmatpush2.bf16.msra.mxu0 0
    %789 = vmatprep.subr.bf16.mxu0 0
    %790 = vmatpush2.bf16.msra.mxu0 0
    %791 = vmatprep.subr.bf16.mxu0 0
    %792 = vmatpush2.bf16.msra.mxu0 0
    %793 = vmatprep.subr.bf16.mxu0 0
    %794 = vmatpush2.bf16.msra.mxu0 0
    %795 = vmatprep.subr.bf16.mxu0 0
    %796 = vmatpush2.bf16.msra.mxu0 0
    %797 = vmatprep.subr.bf16.mxu0 0
    %798 = vmatpush2.bf16.msra.mxu0 0
    %799 = vmatprep.subr.bf16.mxu0 0
    %800 = vmatpush2.bf16.msra.mxu0 0
    %801 = vmatprep.subr.bf16.mxu0 0
    %802 = vmatpush2.bf16.msra.mxu0 0
    %803 = vmatprep.mubr.bf16.mxu0 0
    %804 = vmatmul.mubr.bf16.gmra.mxu0 %v713
    %v805 = vpop.f32.mrf.mxu0
    %v806 = vadd.f32 %v172, %v805
    %v807 = vpop.f32.mrf.mxu0
    %v808 = vadd.f32 %v174, %v807
    %v809 = vpop.f32.mrf.mxu0
    %v810 = vadd.f32 %v178, %v809
    %v811 = vpop.f32.mrf.mxu0
    %v812 = vadd.f32 %v180, %v811
    %813 = vdwg.mxu0
    %v814 = vmax.f32 %v763, 0.0
    %v815 = vmax.f32 %v765, 0.0
    %v816 = vmax.f32 %v806, 0.0
    %v817 = vmax.f32 %v808, 0.0
    %v818 = vmax.f32 %v767, 0.0
    %v819 = vmax.f32 %v769, 0.0
    %v820 = vmax.f32 %v810, 0.0
    %v821 = vmax.f32 %v812, 0.0
    %822 = vst [vmem:[#allocation6] sm:$0xff] %v814
    %823 = vst [vmem:[#allocation6 + $0x8] sm:$0xff] %v815
    %824 = vst [vmem:[#allocation6 + $0x10] sm:$0xff] %v816
    %825 = vst [vmem:[#allocation6 + $0x18] sm:$0xff] %v817
    %826 = vst [vmem:[#allocation6 + $0x20] sm:$0xff] %v818
    %827 = vst [vmem:[#allocation6 + $0x28] sm:$0xff] %v819
    %828 = vst [vmem:[#allocation6 + $0x30] sm:$0xff] %v820
    %829 = vst [vmem:[#allocation6 + $0x38] sm:$0xff] %v821
    // Predicated region
    $region26: #{tpu_custom_call.1} parent=1 // pred_check
      _
    $region27: #{tpu_custom_call.1} parent=1 // pred_check_branch
      %831 = sbr.rel (0) target = $region29
    $region28: #{tpu_custom_call.1} parent=1 // pred_region
      %s833 = ssub.s32 1024, 1024
      %834 = vsyncadd [#allocation5], %s833
      %s835 = sshll.u32 [#allocation6], 4
      %s836 = int_to_ptr.vmem [resolvable:$true] %s835
      %841 = dma.vmem_to_hbm [thread:$0]  %s836, 1024, %s5, [#allocation5], 512, 512, 32
    $region29: #{tpu_custom_call.1} parent=1 // pred_fallthru
      _
    // Predicated region
    $region30: #{tpu_custom_call.1} parent=1 // pred_check
      _
    $region31: #{tpu_custom_call.1} parent=1 // pred_check_branch
      %843 = sbr.rel (0) target = $region33
    $region32: #{tpu_custom_call.1} parent=1 // pred_region
      %844 = dma.done [#allocation5], 1024
    $region33: #{tpu_custom_call.1} parent=1 // pred_fallthru
      _
    %845 = vsyncpa [#allocation4], 1
    %846 = vsyncpa [#allocation5], 1

</llo_original>
